<compile_context>
chip_gen: v5e
topology: v5e:2x2
jax: 0.10.0
libtpu: 0.0.40
codegen_flags: <defaults>
</compile_context>

<pallas_src>
import jax
import jax.numpy as jnp
import numpy as np
from jax import lax
from jax.experimental import pallas as pl
from jax.experimental.pallas import tpu as pltpu

# ---- small-shape analogue of MultiBranchCosineIncrementalNet config --------
BATCH       = 2
CHANNELS    = 3
SPATIAL     = 16
PATCH       = 8
NUM_PATCHES = (SPATIAL // PATCH) ** 2          # 4 patches per image
PATCH_DIM   = CHANNELS * PATCH * PATCH         # 192
OUT_DIM     = 64                               # backbone.out_dim (768 in the real model)
NUM_BRANCH  = 2                                # dual-branch
FEATURE_DIM = OUT_DIM * NUM_BRANCH             # 128  (self._feature_dim)
NB_CLASSES  = 16                               # args['init_cls']
SIGMA_INIT  = 2.5                              # CosineLinear sigma

IMG_DIM = CHANNELS * SPATIAL * SPATIAL         # 768  (flattened image = 6 x 128 lanes)
K_PAD   = 896                                  # 768 image lanes + ones/bias lane + zero pad
CLS_PAD = 128                                  # class dim 16 -> 128 lanes


# ------------------------------- kernel -------------------------------------
def multibranch_cosine_kernel(x_ref, w_big_ref, wn_ref, feat_ref, logits_ref):
    # Fused dual-branch "backbones": patchify + mean-pool + concat + bias are all
    # pre-folded into w_big, so features come from ONE MXU matmul (bf16 in, f32 acc).
    feats = jnp.dot(x_ref[...], w_big_ref[...],
                    preferred_element_type=jnp.float32)            # (TM, 128) f32

    # CosineLinear head: sigma and weight-row normalization are pre-folded into wn_ref.
    # Issue the second MXU push immediately (row scaling commutes with right-mult) ...
    raw = jnp.dot(feats.astype(jnp.bfloat16), wn_ref[...],
                  preferred_element_type=jnp.float32)              # (TM, 128) f32

    # ... while the input normalization (XLU cross-lane reduce + EUP rsqrt) overlaps.
    # rsqrt(max(ss, eps^2)) == 1 / max(||x||, eps)  -> matches F.normalize(eps=1e-12).
    inv_norm = lax.rsqrt(
        jnp.maximum(jnp.sum(feats * feats, axis=1, keepdims=True), 1e-24))

    feat_ref[...]   = feats
    logits_ref[...] = raw * inv_norm


# ------------------------------- wrappers ------------------------------------
def patchify(x_nchw, patch):
    b, c, h, w = x_nchw.shape
    ph, pw = h // patch, w // patch
    x = x_nchw.reshape(b, c, ph, patch, pw, patch)
    x = x.transpose(0, 2, 4, 1, 3, 5)              # (B, ph, pw, C, p, p)
    return x.reshape(b, ph * pw, c * patch * patch)


def prepare_params(params):
    """Parameter-only preprocessing — run once per task, NOT per forward."""
    # dual-branch concat fused into one weight matrix / bias vector
    w_cat = jnp.concatenate([params["w_emb0"], params["w_emb1"]], axis=1)   # (192, 128)
    b_cat = jnp.concatenate([params["b_emb0"], params["b_emb1"]], axis=0)   # (128,)

    # Fold patchify permutation + mean-pool over patches into the weight:
    #   f[b,o] = sum_{c,h,w} x[b,c,h,w] * (1/NP) * W[c*p^2 + (h%p)*p + (w%p), o]
    c, h, w = np.meshgrid(np.arange(CHANNELS), np.arange(SPATIAL),
                          np.arange(SPATIAL), indexing="ij")
    row = (c * PATCH * PATCH + (h % PATCH) * PATCH + (w % PATCH)).reshape(-1)  # (768,)
    w_img = jnp.take(w_cat, jnp.asarray(row), axis=0) / NUM_PATCHES            # (768, 128)

    # Big fused weight: image rows, then the bias row (hit by the ones-lane), then zeros.
    w_big = jnp.zeros((K_PAD, FEATURE_DIM), jnp.float32)
    w_big = w_big.at[:IMG_DIM].set(w_img)
    w_big = w_big.at[IMG_DIM].set(b_cat)
    w_big = w_big.astype(jnp.bfloat16)                                         # (896, 128)

    # CosineLinear: normalize weight rows, fold sigma, transpose, lane-pad, bf16.
    wfc = params["fc_weight"]                                                  # (16, 128)
    w_n = wfc / jnp.maximum(jnp.linalg.norm(wfc, axis=1, keepdims=True), 1e-12)
    wn = (params["sigma"] * w_n).T                                             # (128, 16)
    wn = jnp.pad(wn, ((0, 0), (0, CLS_PAD - NB_CLASSES))).astype(jnp.bfloat16) # (128, 128)
    return {"w_big": w_big, "wn": wn}


@jax.jit
def multibranch_forward(x_nchw, prep):
    b = x_nchw.shape[0]
    x_flat = x_nchw.reshape(b, IMG_DIM).astype(jnp.float32)            # (B, 768)
    # Append the ones-lane (selects the bias row of w_big), then EXPLICIT zero pad of
    # rows and lanes — pad lanes meet zero weight rows, so no NaN*0 hazard.
    x_aug = jnp.concatenate([x_flat, jnp.ones((b, 1), jnp.float32)], axis=1)

    rows = max(8, -(-b // 8) * 8)              # sublane-align batch
    tm   = min(rows, 256)                      # row tile; parallel grid for big batches
    rows = -(-rows // tm) * tm
    x_pad = jnp.pad(x_aug, ((0, rows - b), (0, K_PAD - (IMG_DIM + 1))))
    x_pad = x_pad.astype(jnp.bfloat16)                                  # (rows, 896)

    feats_pad, logits_pad = pl.pallas_call(
        multibranch_cosine_kernel,
        out_shape=(
            jax.ShapeDtypeStruct((rows, FEATURE_DIM), jnp.float32),     # features (padded rows)
            jax.ShapeDtypeStruct((rows, CLS_PAD), jnp.float32),         # logits   (padded rows/classes)
        ),
        grid=(rows // tm,),
        in_specs=[
            pl.BlockSpec((tm, K_PAD), lambda i: (i, 0)),
            pl.BlockSpec((K_PAD, FEATURE_DIM), lambda i: (0, 0)),
            pl.BlockSpec((FEATURE_DIM, CLS_PAD), lambda i: (0, 0)),
        ],
        out_specs=(
            pl.BlockSpec((tm, FEATURE_DIM), lambda i: (i, 0)),
            pl.BlockSpec((tm, CLS_PAD), lambda i: (i, 0)),
        ),
        compiler_params=pltpu.CompilerParams(dimension_semantics=("parallel",)),
    )(x_pad, prep["w_big"], prep["wn"])

    # Return PADDED outputs (rows >= batch, classes padded to 128); consumer slices.
    return {"logits": logits_pad, "features": feats_pad}


def make_params(key):
    ks = jax.random.split(key, 5)
    w0 = jax.random.normal(ks[0], (PATCH_DIM, OUT_DIM), jnp.float32) * 0.05
    w1 = jax.random.normal(ks[1], (PATCH_DIM, OUT_DIM), jnp.float32) * 0.05
    b0 = jax.random.normal(ks[2], (OUT_DIM,), jnp.float32) * 0.01
    b1 = jax.random.normal(ks[3], (OUT_DIM,), jnp.float32) * 0.01
    fc_w = jax.random.normal(ks[4], (NB_CLASSES, FEATURE_DIM), jnp.float32) * 0.1
    return {"w_emb0": w0, "w_emb1": w1, "b_emb0": b0, "b_emb1": b1,
            "fc_weight": fc_w, "sigma": jnp.float32(SIGMA_INIT)}


def reference(x_nchw, params):
    """Un-fused pure-JAX (f32) reference of MultiBranchCosineIncrementalNet.forward."""
    patches = patchify(x_nchw.astype(jnp.float32), PATCH)
    pooled = patches.mean(axis=1)
    f0 = pooled @ params["w_emb0"] + params["b_emb0"]          # branch 0 backbone
    f1 = pooled @ params["w_emb1"] + params["b_emb1"]          # branch 1 backbone
    features = jnp.concatenate([f0, f1], axis=1)               # torch.cat(features, 1)
    x_n = features / jnp.maximum(
        jnp.linalg.norm(features, axis=1, keepdims=True), 1e-12)
    w = params["fc_weight"]
    w_n = w / jnp.maximum(jnp.linalg.norm(w, axis=1, keepdims=True), 1e-12)
    logits = params["sigma"] * (x_n @ w_n.T)                   # CosineLinear
    return logits, features


if __name__ == "__main__":
    key = jax.random.PRNGKey(0)
    k_x, k_p = jax.random.split(key)
    x = jax.random.normal(k_x, (BATCH, CHANNELS, SPATIAL, SPATIAL), jnp.float32)
    params = make_params(k_p)
    prep = prepare_params(params)          # once-per-task parameter folding

    out = multibranch_forward(x, prep)
    jax.block_until_ready(out)

    ref_logits, ref_feats = reference(x, params)
    feats  = np.asarray(out["features"])[:BATCH]                 # consumer-side slicing
    logits = np.asarray(out["logits"])[:BATCH, :NB_CLASSES]
    np.testing.assert_allclose(feats, np.asarray(ref_feats), rtol=1e-2, atol=1e-2)
    np.testing.assert_allclose(logits, np.asarray(ref_logits), rtol=1e-2, atol=1e-2)
    print("KERNEL_OK")
</pallas_src>

<mosaic_0001>
module attributes {stable_mosaic.version = 11 : i64} {
  func.func @multibranch_cosine_kernel(%arg0: i32, %arg1: memref<8x896xbf16, #tpu.memory_space<vmem>>, %arg2: memref<896x128xbf16, #tpu.memory_space<vmem>>, %arg3: memref<128x128xbf16, #tpu.memory_space<vmem>>, %arg4: memref<8x128xf32, #tpu.memory_space<vmem>>, %arg5: memref<8x128xf32, #tpu.memory_space<vmem>>) attributes {dimension_semantics = [#tpu.dimension_semantics<parallel>], iteration_bounds = array<i64: 1>, scalar_prefetch = 0 : i64, scratch_operands = 0 : i64, tpu.core_type = #tpu.core_type<tc>, window_params = [{transform_indices = @transform_0, window_bounds = array<i64: 8, 896>}, {pipeline_mode = #tpu.pipeline_mode<synchronous>, transform_indices = @transform_1, window_bounds = array<i64: 896, 128>}, {pipeline_mode = #tpu.pipeline_mode<synchronous>, transform_indices = @transform_2, window_bounds = array<i64: 128, 128>}, {transform_indices = @transform_3, window_bounds = array<i64: 8, 128>}, {transform_indices = @transform_4, window_bounds = array<i64: 8, 128>}]} {
    %c0 = arith.constant 0 : index
    %c0_0 = arith.constant 0 : index
    %0 = vector.load %arg1[%c0, %c0_0] : memref<8x896xbf16, #tpu.memory_space<vmem>>, vector<8x896xbf16>
    %c0_1 = arith.constant 0 : index
    %c0_2 = arith.constant 0 : index
    %1 = vector.load %arg2[%c0_1, %c0_2] : memref<896x128xbf16, #tpu.memory_space<vmem>>, vector<896x128xbf16>
    %cst = arith.constant dense<0.000000e+00> : vector<8x128xf32>
    %2 = tpu.matmul %0, %1, %cst {dimension_numbers = #tpu.dot_dimension_numbers<[1], [0], [0], [1], [0, 0, 1, 1], [], []>} : vector<8x896xbf16>, vector<896x128xbf16>, vector<8x128xf32> -> vector<8x128xf32>
    %3 = arith.truncf %2 : vector<8x128xf32> to vector<8x128xbf16>
    %c0_3 = arith.constant 0 : index
    %c0_4 = arith.constant 0 : index
    %4 = vector.load %arg3[%c0_3, %c0_4] : memref<128x128xbf16, #tpu.memory_space<vmem>>, vector<128x128xbf16>
    %cst_5 = arith.constant dense<0.000000e+00> : vector<8x128xf32>
    %5 = tpu.matmul %3, %4, %cst_5 {dimension_numbers = #tpu.dot_dimension_numbers<[1], [0], [0], [1], [0, 0, 1, 1], [], []>} : vector<8x128xbf16>, vector<128x128xbf16>, vector<8x128xf32> -> vector<8x128xf32>
    %6 = arith.mulf %2, %2 : vector<8x128xf32>
    %cst_6 = arith.constant dense<0.000000e+00> : vector<8xf32>
    %7 = vector.multi_reduction <add>, %6, %cst_6 [1] : vector<8x128xf32> to vector<8xf32>
    %8 = vector.shape_cast %7 : vector<8xf32> to vector<8x1xf32>
    %cst_7 = arith.constant 1.000000e-24 : f32
    %9 = vector.broadcast %cst_7 : f32 to vector<8x1xf32>
    %10 = arith.maximumf %8, %9 : vector<8x1xf32>
    %11 = math.rsqrt %10 : vector<8x1xf32>
    %c0_8 = arith.constant 0 : index
    %c0_9 = arith.constant 0 : index
    %12 = vector.load %arg4[%c0_8, %c0_9] : memref<8x128xf32, #tpu.memory_space<vmem>>, vector<8x128xf32>
    tpu.vector_store %arg4[%c0_8, %c0_9], %2 {strides = array<i32>} : memref<8x128xf32, #tpu.memory_space<vmem>>, vector<8x128xf32>,
    %13 = vector.broadcast %11 : vector<8x1xf32> to vector<8x128xf32>
    %14 = arith.mulf %5, %13 : vector<8x128xf32>
    %c0_10 = arith.constant 0 : index
    %c0_11 = arith.constant 0 : index
    %15 = vector.load %arg5[%c0_10, %c0_11] : memref<8x128xf32, #tpu.memory_space<vmem>>, vector<8x128xf32>
    tpu.vector_store %arg5[%c0_10, %c0_11], %14 {strides = array<i32>} : memref<8x128xf32, #tpu.memory_space<vmem>>, vector<8x128xf32>,
    return
  }
  func.func @transform_0(%arg0: i32) -> (i32, i32) {
    %c0_i32 = arith.constant 0 : i32
    %c0_i32_0 = arith.constant 0 : i32
    return %arg0, %c0_i32 : i32, i32
  }
  func.func @transform_1(%arg0: i32) -> (i32, i32) {
    %c0_i32 = arith.constant 0 : i32
    %c0_i32_0 = arith.constant 0 : i32
    %c0_i32_1 = arith.constant 0 : i32
    return %c0_i32, %c0_i32_0 : i32, i32
  }
  func.func @transform_2(%arg0: i32) -> (i32, i32) {
    %c0_i32 = arith.constant 0 : i32
    %c0_i32_0 = arith.constant 0 : i32
    %c0_i32_1 = arith.constant 0 : i32
    return %c0_i32, %c0_i32_0 : i32, i32
  }
  func.func @transform_3(%arg0: i32) -> (i32, i32) {
    %c0_i32 = arith.constant 0 : i32
    %c0_i32_0 = arith.constant 0 : i32
    return %arg0, %c0_i32 : i32, i32
  }
  func.func @transform_4(%arg0: i32) -> (i32, i32) {
    %c0_i32 = arith.constant 0 : i32
    %c0_i32_0 = arith.constant 0 : i32
    return %arg0, %c0_i32 : i32, i32
  }
}

</mosaic_0001>

<llo_original>
// kernel: multibranch_forward.1
$region0: #{multibranch_forward.1}
  #allocation0 [shape = 'u32[]', space=smem, size = 0x4, offset = 0x4, fixed_abs, tag = 'smem constant byte address 0x4 - core index']
  #allocation1 [shape = 'u32[72,128]{1,0:T(1,128)}', space=vmem, size = 0x9000, scoped, tag = 'internal scratch']
  %s0 = inlined_call_operand.vmem [shape: bf16[8,896], index: 0, kind: input, shape index: {}]
  %s1 = inlined_call_operand.hbm [shape: bf16[896,128], index: 1, kind: input, shape index: {}]
  %s2 = inlined_call_operand.vmem [shape: bf16[128,128], index: 2, kind: input, shape index: {}]
  %s3 = inlined_call_operand.hbm [shape: f32[8,128], index: 3, kind: output, shape index: {0}]
  %s4 = inlined_call_operand.hbm [shape: f32[8,128], index: 4, kind: output, shape index: {1}]
  %5 = xla_tuple %s3, %s4
  %s6 = sld [smem:[#allocation0]]
  $region34: #{multibranch_forward.1} parent=0
    _
  %s8 = ssub.s32 1, %s6
  %s9 = scalar_select 0, %s8, %s6
  $region1: #{multibranch_forward.1} parent=0
    #allocation2 [shape = 'u8[229376]{0}', space=vmem, size = 0x38000, scoped, tag = 'input window, operand 1, single buffered']
    #allocation3 [shape = 's32[1]{0}', space=sflag, size = 0x4, scoped, tag = 'scoped memory for multibranch_forward.1']
    #allocation4 [shape = 's32[1]{0}', space=sflag, size = 0x4, scoped, tag = 'scoped memory for multibranch_forward.1']
    #allocation5 [shape = 'u8[4096]{0}', space=vmem, size = 0x1000, scoped, tag = 'output window, operand 0, single buffered']
    #allocation6 [shape = 'u8[4096]{0}', space=vmem, size = 0x1000, scoped, tag = 'output window, operand 1, single buffered']
    #allocation7 [shape = 's32[1]{0}', space=sflag, size = 0x4, scoped, tag = 'scoped memory for multibranch_forward.1']
    %10 = vsyncpa [#allocation3], 0
    %11 = vsyncpa [#allocation4], 0
    %12 = vsyncpa [#allocation7], 0
    // Predicated region
    $region2: #{multibranch_forward.1} parent=1 // pred_check
      _
    $region3: #{multibranch_forward.1} parent=1 // pred_check_branch
      %14 = sbr.rel (0) target = $region5
    $region4: #{multibranch_forward.1} parent=1 // pred_region
      _
    $region5: #{multibranch_forward.1} parent=1 // pred_fallthru
      _
    // Predicated region
    $region6: #{multibranch_forward.1} parent=1 // pred_check
      _
    $region7: #{multibranch_forward.1} parent=1 // pred_check_branch
      %16 = sbr.rel (0) target = $region9
    $region8: #{multibranch_forward.1} parent=1 // pred_region
      %18 = vsyncadd [#allocation3], 0
      %s19 = sshll.u32 %s1, 4
      %s20 = int_to_ptr.hbm [resolvable:$true] %s19
      %s21 = sshll.u32 [#allocation2], 4
      %s22 = int_to_ptr.vmem [resolvable:$true] %s21
      %27 = dma.hbm_to_vmem [thread:$0]  %s20, 7168, %s22, [#allocation3], 64, 64, 4
    $region9: #{multibranch_forward.1} parent=1 // pred_fallthru
      _
    // Predicated region
    $region10: #{multibranch_forward.1} parent=1 // pred_check
      _
    $region11: #{multibranch_forward.1} parent=1 // pred_check_branch
      %29 = sbr.rel (0) target = $region13
    $region12: #{multibranch_forward.1} parent=1 // pred_region
      _
    $region13: #{multibranch_forward.1} parent=1 // pred_fallthru
      _
    // Predicated region
    $region14: #{multibranch_forward.1} parent=1 // pred_check
      _
    $region15: #{multibranch_forward.1} parent=1 // pred_check_branch
      %31 = sbr.rel (0) target = $region17
    $region16: #{multibranch_forward.1} parent=1 // pred_region
      %33 = dma.done [#allocation3], 7168
    $region17: #{multibranch_forward.1} parent=1 // pred_fallthru
      _
    %v34 = vld [vmem:[%s0] sm:$0xff]
    %v35 = vld [vmem:[%s0 + $0x8] sm:$0xff]
    %v36 = vld [vmem:[%s0 + $0x10] sm:$0xff]
    %v37 = vld [vmem:[%s0 + $0x18] sm:$0xf]
    %v38 = vld [vmem:[#allocation2] sm:$0xf]
    %v39 = vld [vmem:[#allocation2 + $0x4] sm:$0xf]
    %v40 = vld [vmem:[#allocation2 + $0x8] sm:$0xf]
    %v41 = vld [vmem:[#allocation2 + $0xc] sm:$0xf]
    %v42 = vld [vmem:[#allocation2 + $0x10] sm:$0xf]
    %v43 = vld [vmem:[#allocation2 + $0x14] sm:$0xf]
    %v44 = vld [vmem:[#allocation2 + $0x18] sm:$0xf]
    %v45 = vld [vmem:[#allocation2 + $0x1c] sm:$0xf]
    %v46 = vld [vmem:[#allocation2 + $0x20] sm:$0xf]
    %v47 = vld [vmem:[#allocation2 + $0x24] sm:$0xf]
    %v48 = vld [vmem:[#allocation2 + $0x28] sm:$0xf]
    %v49 = vld [vmem:[#allocation2 + $0x2c] sm:$0xf]
    %v50 = vld [vmem:[#allocation2 + $0x30] sm:$0xf]
    %v51 = vld [vmem:[#allocation2 + $0x34] sm:$0xf]
    %v52 = vld [vmem:[#allocation2 + $0x38] sm:$0xf]
    %v53 = vld [vmem:[#allocation2 + $0x3c] sm:$0xf]
    %v54 = vld [vmem:[#allocation2 + $0x40] sm:$0xf]
    %v55 = vld [vmem:[#allocation2 + $0x44] sm:$0xf]
    %v56 = vld [vmem:[#allocation2 + $0x48] sm:$0xf]
    %v57 = vld [vmem:[#allocation2 + $0x4c] sm:$0xf]
    %v58 = vld [vmem:[#allocation2 + $0x50] sm:$0xf]
    %v59 = vld [vmem:[#allocation2 + $0x54] sm:$0xf]
    %v60 = vld [vmem:[#allocation2 + $0x58] sm:$0xf]
    %v61 = vld [vmem:[#allocation2 + $0x5c] sm:$0xf]
    %v62 = vld [vmem:[#allocation2 + $0x60] sm:$0xf]
    %v63 = vld [vmem:[#allocation2 + $0x64] sm:$0xf]
    %v64 = vld [vmem:[#allocation2 + $0x68] sm:$0xf]
    %v65 = vld [vmem:[#allocation2 + $0x6c] sm:$0xf]
    %v66 = vld [vmem:[#allocation2 + $0x70] sm:$0xf]
    %v67 = vld [vmem:[#allocation2 + $0x74] sm:$0xf]
    %v68 = vld [vmem:[#allocation2 + $0x78] sm:$0xf]
    %v69 = vld [vmem:[#allocation2 + $0x7c] sm:$0xf]
    %v70 = vld [vmem:[#allocation2 + $0x80] sm:$0xf]
    %v71 = vld [vmem:[#allocation2 + $0x84] sm:$0xf]
    %v72 = vld [vmem:[#allocation2 + $0x88] sm:$0xf]
    %v73 = vld [vmem:[#allocation2 + $0x8c] sm:$0xf]
    %v74 = vld [vmem:[#allocation2 + $0x90] sm:$0xf]
    %v75 = vld [vmem:[#allocation2 + $0x94] sm:$0xf]
    %v76 = vld [vmem:[#allocation2 + $0x98] sm:$0xf]
    %v77 = vld [vmem:[#allocation2 + $0x9c] sm:$0xf]
    %v78 = vld [vmem:[#allocation2 + $0xa0] sm:$0xf]
    %v79 = vld [vmem:[#allocation2 + $0xa4] sm:$0xf]
    %v80 = vld [vmem:[#allocation2 + $0xa8] sm:$0xf]
    %v81 = vld [vmem:[#allocation2 + $0xac] sm:$0xf]
    %v82 = vld [vmem:[#allocation2 + $0xb0] sm:$0xf]
    %v83 = vld [vmem:[#allocation2 + $0xb4] sm:$0xf]
    %v84 = vld [vmem:[#allocation2 + $0xb8] sm:$0xf]
    %v85 = vld [vmem:[#allocation2 + $0xbc] sm:$0xf]
    %v86 = vld [vmem:[#allocation2 + $0xc0] sm:$0xf]
    %v87 = vld [vmem:[#allocation2 + $0xc4] sm:$0xf]
    %v88 = vld [vmem:[#allocation2 + $0xc8] sm:$0xf]
    %v89 = vld [vmem:[#allocation2 + $0xcc] sm:$0xf]
    %v90 = vld [vmem:[#allocation2 + $0xd0] sm:$0xf]
    %v91 = vld [vmem:[#allocation2 + $0xd4] sm:$0xf]
    %v92 = vld [vmem:[#allocation2 + $0xd8] sm:$0xf]
    %v93 = vld [vmem:[#allocation2 + $0xdc] sm:$0xf]
    %v94 = vld [vmem:[#allocation2 + $0xe0] sm:$0xf]
    %v95 = vld [vmem:[#allocation2 + $0xe4] sm:$0xf]
    %v96 = vld [vmem:[#allocation2 + $0xe8] sm:$0xf]
    %v97 = vld [vmem:[#allocation2 + $0xec] sm:$0xf]
    %v98 = vld [vmem:[#allocation2 + $0xf0] sm:$0xf]
    %v99 = vld [vmem:[#allocation2 + $0xf4] sm:$0xf]
    %v100 = vld [vmem:[#allocation2 + $0xf8] sm:$0xf]
    %v101 = vld [vmem:[#allocation2 + $0xfc] sm:$0xf]
    %v102 = vld [vmem:[#allocation2 + $0x100] sm:$0xf]
    %v103 = vld [vmem:[#allocation2 + $0x104] sm:$0xf]
    %v104 = vld [vmem:[#allocation2 + $0x108] sm:$0xf]
    %v105 = vld [vmem:[#allocation2 + $0x10c] sm:$0xf]
    %v106 = vld [vmem:[#allocation2 + $0x110] sm:$0xf]
    %v107 = vld [vmem:[#allocation2 + $0x114] sm:$0xf]
    %v108 = vld [vmem:[#allocation2 + $0x118] sm:$0xf]
    %v109 = vld [vmem:[#allocation2 + $0x11c] sm:$0xf]
    %v110 = vld [vmem:[#allocation2 + $0x120] sm:$0xf]
    %v111 = vld [vmem:[#allocation2 + $0x124] sm:$0xf]
    %v112 = vld [vmem:[#allocation2 + $0x128] sm:$0xf]
    %v113 = vld [vmem:[#allocation2 + $0x12c] sm:$0xf]
    %v114 = vld [vmem:[#allocation2 + $0x130] sm:$0xf]
    %v115 = vld [vmem:[#allocation2 + $0x134] sm:$0xf]
    %v116 = vld [vmem:[#allocation2 + $0x138] sm:$0xf]
    %v117 = vld [vmem:[#allocation2 + $0x13c] sm:$0xf]
    %v118 = vld [vmem:[#allocation2 + $0x140] sm:$0xf]
    %v119 = vld [vmem:[#allocation2 + $0x144] sm:$0xf]
    %v120 = vld [vmem:[#allocation2 + $0x148] sm:$0xf]
    %v121 = vld [vmem:[#allocation2 + $0x14c] sm:$0xf]
    %v122 = vld [vmem:[#allocation2 + $0x150] sm:$0xf]
    %v123 = vld [vmem:[#allocation2 + $0x154] sm:$0xf]
    %v124 = vld [vmem:[#allocation2 + $0x158] sm:$0xf]
    %v125 = vld [vmem:[#allocation2 + $0x15c] sm:$0xf]
    %v126 = vld [vmem:[#allocation2 + $0x160] sm:$0xf]
    %v127 = vld [vmem:[#allocation2 + $0x164] sm:$0xf]
    %v128 = vld [vmem:[#allocation2 + $0x168] sm:$0xf]
    %v129 = vld [vmem:[#allocation2 + $0x16c] sm:$0xf]
    %v130 = vld [vmem:[#allocation2 + $0x170] sm:$0xf]
    %v131 = vld [vmem:[#allocation2 + $0x174] sm:$0xf]
    %v132 = vld [vmem:[#allocation2 + $0x178] sm:$0xf]
    %v133 = vld [vmem:[#allocation2 + $0x17c] sm:$0xf]
    %v134 = vld [vmem:[#allocation2 + $0x180] sm:$0xf]
    %v135 = vld [vmem:[#allocation2 + $0x184] sm:$0xf]
    %v136 = vld [vmem:[#allocation2 + $0x188] sm:$0xf]
    %v137 = vld [vmem:[#allocation2 + $0x18c] sm:$0xf]
    %v138 = vld [vmem:[#allocation2 + $0x190] sm:$0xf]
    %v139 = vld [vmem:[#allocation2 + $0x194] sm:$0xf]
    %v140 = vld [vmem:[#allocation2 + $0x198] sm:$0xf]
    %v141 = vld [vmem:[#allocation2 + $0x19c] sm:$0xf]
    %v142 = vld [vmem:[#allocation2 + $0x1a0] sm:$0xf]
    %v143 = vld [vmem:[#allocation2 + $0x1a4] sm:$0xf]
    %v144 = vld [vmem:[#allocation2 + $0x1a8] sm:$0xf]
    %v145 = vld [vmem:[#allocation2 + $0x1ac] sm:$0xf]
    %v146 = vld [vmem:[#allocation2 + $0x1b0] sm:$0xf]
    %v147 = vld [vmem:[#allocation2 + $0x1b4] sm:$0xf]
    %v148 = vld [vmem:[#allocation2 + $0x1b8] sm:$0xf]
    %v149 = vld [vmem:[#allocation2 + $0x1bc] sm:$0xf]
    %v154 = vunpack.c.l.b16 %v34
    %v155 = vunpack.c.h.b16 %v34
    %v156 = vunpack.c.l.b16 %v35
    %v157 = vunpack.c.h.b16 %v35
    %v158 = vunpack.c.l.b16 %v36
    %v159 = vunpack.c.h.b16 %v36
    %v160 = vunpack.c.l.b16 %v37
    %v161 = vpack.c.b16 %v154, %v154
    %v162 = vpack.c.b16 %v155, %v155
    %v163 = vpack.c.b16 %v156, %v156
    %v164 = vpack.c.b16 %v157, %v157
    %v165 = vpack.c.b16 %v158, %v158
    %v166 = vpack.c.b16 %v159, %v159
    %v167 = vpack.c.b16 %v160, %v160
    %v287 = vunpack.c.l.b16 %v38
    %v288 = vunpack.c.l.b16 %v39
    %v289 = vunpack.c.l.b16 %v40
    %v290 = vunpack.c.l.b16 %v41
    %v291 = vunpack.c.l.b16 %v42
    %v292 = vunpack.c.l.b16 %v43
    %v293 = vunpack.c.l.b16 %v44
    %v294 = vunpack.c.l.b16 %v45
    %v295 = vunpack.c.l.b16 %v46
    %v296 = vunpack.c.l.b16 %v47
    %v297 = vunpack.c.l.b16 %v48
    %v298 = vunpack.c.l.b16 %v49
    %v299 = vunpack.c.l.b16 %v50
    %v300 = vunpack.c.l.b16 %v51
    %v301 = vunpack.c.l.b16 %v52
    %v302 = vunpack.c.l.b16 %v53
    %v303 = vunpack.c.l.b16 %v54
    %v304 = vunpack.c.l.b16 %v55
    %v305 = vunpack.c.l.b16 %v56
    %v306 = vunpack.c.l.b16 %v57
    %v307 = vunpack.c.l.b16 %v58
    %v308 = vunpack.c.l.b16 %v59
    %v309 = vunpack.c.l.b16 %v60
    %v310 = vunpack.c.l.b16 %v61
    %v311 = vunpack.c.l.b16 %v62
    %v312 = vunpack.c.l.b16 %v63
    %v313 = vunpack.c.l.b16 %v64
    %v314 = vunpack.c.l.b16 %v65
    %v315 = vunpack.c.l.b16 %v66
    %v316 = vunpack.c.l.b16 %v67
    %v317 = vunpack.c.l.b16 %v68
    %v318 = vunpack.c.l.b16 %v69
    %v319 = vunpack.c.l.b16 %v70
    %v320 = vunpack.c.l.b16 %v71
    %v321 = vunpack.c.l.b16 %v72
    %v322 = vunpack.c.l.b16 %v73
    %v323 = vunpack.c.l.b16 %v74
    %v324 = vunpack.c.l.b16 %v75
    %v325 = vunpack.c.l.b16 %v76
    %v326 = vunpack.c.l.b16 %v77
    %v327 = vunpack.c.l.b16 %v78
    %v328 = vunpack.c.l.b16 %v79
    %v329 = vunpack.c.l.b16 %v80
    %v330 = vunpack.c.l.b16 %v81
    %v331 = vunpack.c.l.b16 %v82
    %v332 = vunpack.c.l.b16 %v83
    %v333 = vunpack.c.l.b16 %v84
    %v334 = vunpack.c.l.b16 %v85
    %v335 = vunpack.c.l.b16 %v86
    %v336 = vunpack.c.l.b16 %v87
    %v337 = vunpack.c.l.b16 %v88
    %v338 = vunpack.c.l.b16 %v89
    %v339 = vunpack.c.l.b16 %v90
    %v340 = vunpack.c.l.b16 %v91
    %v341 = vunpack.c.l.b16 %v92
    %v342 = vunpack.c.l.b16 %v93
    %v343 = vunpack.c.l.b16 %v94
    %v344 = vunpack.c.l.b16 %v95
    %v345 = vunpack.c.l.b16 %v96
    %v346 = vunpack.c.l.b16 %v97
    %v347 = vunpack.c.l.b16 %v98
    %v348 = vunpack.c.l.b16 %v99
    %v349 = vunpack.c.l.b16 %v100
    %v350 = vunpack.c.l.b16 %v101
    %v351 = vunpack.c.l.b16 %v102
    %v352 = vunpack.c.l.b16 %v103
    %v353 = vunpack.c.l.b16 %v104
    %v354 = vunpack.c.l.b16 %v105
    %v355 = vunpack.c.l.b16 %v106
    %v356 = vunpack.c.l.b16 %v107
    %v357 = vunpack.c.l.b16 %v108
    %v358 = vunpack.c.l.b16 %v109
    %v359 = vunpack.c.l.b16 %v110
    %v360 = vunpack.c.l.b16 %v111
    %v361 = vunpack.c.l.b16 %v112
    %v362 = vunpack.c.l.b16 %v113
    %v363 = vunpack.c.l.b16 %v114
    %v364 = vunpack.c.l.b16 %v115
    %v365 = vunpack.c.l.b16 %v116
    %v366 = vunpack.c.l.b16 %v117
    %v367 = vunpack.c.l.b16 %v118
    %v368 = vunpack.c.l.b16 %v119
    %v369 = vunpack.c.l.b16 %v120
    %v370 = vunpack.c.l.b16 %v121
    %v371 = vunpack.c.l.b16 %v122
    %v372 = vunpack.c.l.b16 %v123
    %v373 = vunpack.c.l.b16 %v124
    %v374 = vunpack.c.l.b16 %v125
    %v375 = vunpack.c.l.b16 %v126
    %v376 = vunpack.c.l.b16 %v127
    %v377 = vunpack.c.l.b16 %v128
    %v378 = vunpack.c.l.b16 %v129
    %v379 = vunpack.c.l.b16 %v130
    %v380 = vunpack.c.l.b16 %v131
    %v381 = vunpack.c.l.b16 %v132
    %v382 = vunpack.c.l.b16 %v133
    %v383 = vunpack.c.l.b16 %v134
    %v384 = vunpack.c.l.b16 %v135
    %v385 = vunpack.c.l.b16 %v136
    %v386 = vunpack.c.l.b16 %v137
    %v387 = vunpack.c.l.b16 %v138
    %v388 = vunpack.c.l.b16 %v139
    %v389 = vunpack.c.l.b16 %v140
    %v390 = vunpack.c.l.b16 %v141
    %v391 = vunpack.c.l.b16 %v142
    %v392 = vunpack.c.l.b16 %v143
    %v393 = vunpack.c.l.b16 %v144
    %v394 = vunpack.c.l.b16 %v145
    %v395 = vunpack.c.l.b16 %v146
    %v396 = vunpack.c.l.b16 %v147
    %v397 = vunpack.c.l.b16 %v148
    %v398 = vunpack.c.l.b16 %v149
    %v399 = vpack.c.b16 %v288, %v287
    %v400 = vpack.c.b16 %v290, %v289
    %v401 = vpack.c.b16 %v292, %v291
    %v402 = vpack.c.b16 %v294, %v293
    %v403 = vpack.c.b16 %v296, %v295
    %v404 = vpack.c.b16 %v298, %v297
    %v405 = vpack.c.b16 %v300, %v299
    %v406 = vpack.c.b16 %v302, %v301
    %v407 = vpack.c.b16 %v304, %v303
    %v408 = vpack.c.b16 %v306, %v305
    %v409 = vpack.c.b16 %v308, %v307
    %v410 = vpack.c.b16 %v310, %v309
    %v411 = vpack.c.b16 %v312, %v311
    %v412 = vpack.c.b16 %v314, %v313
    %v413 = vpack.c.b16 %v316, %v315
    %v414 = vpack.c.b16 %v318, %v317
    %v415 = vpack.c.b16 %v320, %v319
    %v416 = vpack.c.b16 %v322, %v321
    %v417 = vpack.c.b16 %v324, %v323
    %v418 = vpack.c.b16 %v326, %v325
    %v419 = vpack.c.b16 %v328, %v327
    %v420 = vpack.c.b16 %v330, %v329
    %v421 = vpack.c.b16 %v332, %v331
    %v422 = vpack.c.b16 %v334, %v333
    %v423 = vpack.c.b16 %v336, %v335
    %v424 = vpack.c.b16 %v338, %v337
    %v425 = vpack.c.b16 %v340, %v339
    %v426 = vpack.c.b16 %v342, %v341
    %v427 = vpack.c.b16 %v344, %v343
    %v428 = vpack.c.b16 %v346, %v345
    %v429 = vpack.c.b16 %v348, %v347
    %v430 = vpack.c.b16 %v350, %v349
    %v431 = vpack.c.b16 %v352, %v351
    %v432 = vpack.c.b16 %v354, %v353
    %v433 = vpack.c.b16 %v356, %v355
    %v434 = vpack.c.b16 %v358, %v357
    %v435 = vpack.c.b16 %v360, %v359
    %v436 = vpack.c.b16 %v362, %v361
    %v437 = vpack.c.b16 %v364, %v363
    %v438 = vpack.c.b16 %v366, %v365
    %v439 = vpack.c.b16 %v368, %v367
    %v440 = vpack.c.b16 %v370, %v369
    %v441 = vpack.c.b16 %v372, %v371
    %v442 = vpack.c.b16 %v374, %v373
    %v443 = vpack.c.b16 %v376, %v375
    %v444 = vpack.c.b16 %v378, %v377
    %v445 = vpack.c.b16 %v380, %v379
    %v446 = vpack.c.b16 %v382, %v381
    %v447 = vpack.c.b16 %v384, %v383
    %v448 = vpack.c.b16 %v386, %v385
    %v449 = vpack.c.b16 %v388, %v387
    %v450 = vpack.c.b16 %v390, %v389
    %v451 = vpack.c.b16 %v392, %v391
    %v452 = vpack.c.b16 %v394, %v393
    %v453 = vpack.c.b16 %v396, %v395
    %v454 = vpack.c.b16 %v398, %v397
    %511 = vmatpush.bf16.msra.mxu0 %v406
    %512 = vmatpush.bf16.msra.mxu0 %v405
    %513 = vmatpush.bf16.msra.mxu0 %v404
    %514 = vmatpush.bf16.msra.mxu0 %v403
    %515 = vmatpush.bf16.msra.mxu0 %v402
    %516 = vmatpush.bf16.msra.mxu0 %v401
    %517 = vmatpush.bf16.msra.mxu0 %v400
    %518 = vmatpush.bf16.msra.mxu0 %v399
    %519 = vmatmul.bf16.gmra.mxu0 %v161
    %v520 = vpop.f32.mrf.mxu0
    %v521 = vadd.f32 0.0, %v520
    %v522 = vpop.f32.mrf.mxu0
    %523 = vdwg.mxu0
    %524 = vmatpush.bf16.msra.mxu0 %v414
    %525 = vmatpush.bf16.msra.mxu0 %v413
    %526 = vmatpush.bf16.msra.mxu0 %v412
    %527 = vmatpush.bf16.msra.mxu0 %v411
    %528 = vmatpush.bf16.msra.mxu0 %v410
    %529 = vmatpush.bf16.msra.mxu0 %v409
    %530 = vmatpush.bf16.msra.mxu0 %v408
    %531 = vmatpush.bf16.msra.mxu0 %v407
    %532 = vmatmul.bf16.gmra.mxu0 %v162
    %v533 = vpop.f32.mrf.mxu0
    %v534 = vadd.f32 %v521, %v533
    %v535 = vpop.f32.mrf.mxu0
    %536 = vdwg.mxu0
    %537 = vmatpush.bf16.msra.mxu0 %v422
    %538 = vmatpush.bf16.msra.mxu0 %v421
    %539 = vmatpush.bf16.msra.mxu0 %v420
    %540 = vmatpush.bf16.msra.mxu0 %v419
    %541 = vmatpush.bf16.msra.mxu0 %v418
    %542 = vmatpush.bf16.msra.mxu0 %v417
    %543 = vmatpush.bf16.msra.mxu0 %v416
    %544 = vmatpush.bf16.msra.mxu0 %v415
    %545 = vmatmul.bf16.gmra.mxu0 %v163
    %v546 = vpop.f32.mrf.mxu0
    %v547 = vadd.f32 %v534, %v546
    %v548 = vpop.f32.mrf.mxu0
    %549 = vdwg.mxu0
    %550 = vmatpush.bf16.msra.mxu0 %v430
    %551 = vmatpush.bf16.msra.mxu0 %v429
    %552 = vmatpush.bf16.msra.mxu0 %v428
    %553 = vmatpush.bf16.msra.mxu0 %v427
    %554 = vmatpush.bf16.msra.mxu0 %v426
    %555 = vmatpush.bf16.msra.mxu0 %v425
    %556 = vmatpush.bf16.msra.mxu0 %v424
    %557 = vmatpush.bf16.msra.mxu0 %v423
    %558 = vmatmul.bf16.gmra.mxu0 %v164
    %v559 = vpop.f32.mrf.mxu0
    %v560 = vadd.f32 %v547, %v559
    %v561 = vpop.f32.mrf.mxu0
    %562 = vdwg.mxu0
    %563 = vmatpush.bf16.msra.mxu0 %v438
    %564 = vmatpush.bf16.msra.mxu0 %v437
    %565 = vmatpush.bf16.msra.mxu0 %v436
    %566 = vmatpush.bf16.msra.mxu0 %v435
    %567 = vmatpush.bf16.msra.mxu0 %v434
    %568 = vmatpush.bf16.msra.mxu0 %v433
    %569 = vmatpush.bf16.msra.mxu0 %v432
    %570 = vmatpush.bf16.msra.mxu0 %v431
    %571 = vmatmul.bf16.gmra.mxu0 %v165
    %v572 = vpop.f32.mrf.mxu0
    %v573 = vadd.f32 %v560, %v572
    %v574 = vpop.f32.mrf.mxu0
    %575 = vdwg.mxu0
    %576 = vmatpush.bf16.msra.mxu0 %v446
    %577 = vmatpush.bf16.msra.mxu0 %v445
    %578 = vmatpush.bf16.msra.mxu0 %v444
    %579 = vmatpush.bf16.msra.mxu0 %v443
    %580 = vmatpush.bf16.msra.mxu0 %v442
    %581 = vmatpush.bf16.msra.mxu0 %v441
    %582 = vmatpush.bf16.msra.mxu0 %v440
    %583 = vmatpush.bf16.msra.mxu0 %v439
    %584 = vmatmul.bf16.gmra.mxu0 %v166
    %v585 = vpop.f32.mrf.mxu0
    %v586 = vadd.f32 %v573, %v585
    %v587 = vpop.f32.mrf.mxu0
    %588 = vdwg.mxu0
    %589 = vmatpush.bf16.msra.mxu0 %v454
    %590 = vmatpush.bf16.msra.mxu0 %v453
    %591 = vmatpush.bf16.msra.mxu0 %v452
    %592 = vmatpush.bf16.msra.mxu0 %v451
    %593 = vmatpush.bf16.msra.mxu0 %v450
    %594 = vmatpush.bf16.msra.mxu0 %v449
    %595 = vmatpush.bf16.msra.mxu0 %v448
    %596 = vmatpush.bf16.msra.mxu0 %v447
    %597 = vmatmul.bf16.gmra.mxu0 %v167
    %v598 = vpop.f32.mrf.mxu0
    %v599 = vadd.f32 %v586, %v598
    %v600 = vpop.f32.mrf.mxu0
    %601 = vdwg.mxu0
    %v602 = vpack.c.bf16 %v599, %v599
    %v603 = vld [vmem:[%s2] sm:$0xf]
    %v604 = vld [vmem:[%s2 + $0x4] sm:$0xf]
    %v605 = vld [vmem:[%s2 + $0x8] sm:$0xf]
    %v606 = vld [vmem:[%s2 + $0xc] sm:$0xf]
    %v607 = vld [vmem:[%s2 + $0x10] sm:$0xf]
    %v608 = vld [vmem:[%s2 + $0x14] sm:$0xf]
    %v609 = vld [vmem:[%s2 + $0x18] sm:$0xf]
    %v610 = vld [vmem:[%s2 + $0x1c] sm:$0xf]
    %v611 = vld [vmem:[%s2 + $0x20] sm:$0xf]
    %v612 = vld [vmem:[%s2 + $0x24] sm:$0xf]
    %v613 = vld [vmem:[%s2 + $0x28] sm:$0xf]
    %v614 = vld [vmem:[%s2 + $0x2c] sm:$0xf]
    %v615 = vld [vmem:[%s2 + $0x30] sm:$0xf]
    %v616 = vld [vmem:[%s2 + $0x34] sm:$0xf]
    %v617 = vld [vmem:[%s2 + $0x38] sm:$0xf]
    %v618 = vld [vmem:[%s2 + $0x3c] sm:$0xf]
    %v635 = vunpack.c.l.b16 %v603
    %v636 = vunpack.c.l.b16 %v604
    %v637 = vunpack.c.l.b16 %v605
    %v638 = vunpack.c.l.b16 %v606
    %v639 = vunpack.c.l.b16 %v607
    %v640 = vunpack.c.l.b16 %v608
    %v641 = vunpack.c.l.b16 %v609
    %v642 = vunpack.c.l.b16 %v610
    %v643 = vunpack.c.l.b16 %v611
    %v644 = vunpack.c.l.b16 %v612
    %v645 = vunpack.c.l.b16 %v613
    %v646 = vunpack.c.l.b16 %v614
    %v647 = vunpack.c.l.b16 %v615
    %v648 = vunpack.c.l.b16 %v616
    %v649 = vunpack.c.l.b16 %v617
    %v650 = vunpack.c.l.b16 %v618
    %v651 = vpack.c.b16 %v636, %v635
    %v652 = vpack.c.b16 %v638, %v637
    %v653 = vpack.c.b16 %v640, %v639
    %v654 = vpack.c.b16 %v642, %v641
    %v655 = vpack.c.b16 %v644, %v643
    %v656 = vpack.c.b16 %v646, %v645
    %v657 = vpack.c.b16 %v648, %v647
    %v658 = vpack.c.b16 %v650, %v649
    %667 = vmatpush.bf16.msra.mxu0 %v658
    %668 = vmatpush.bf16.msra.mxu0 %v657
    %669 = vmatpush.bf16.msra.mxu0 %v656
    %670 = vmatpush.bf16.msra.mxu0 %v655
    %671 = vmatpush.bf16.msra.mxu0 %v654
    %672 = vmatpush.bf16.msra.mxu0 %v653
    %673 = vmatpush.bf16.msra.mxu0 %v652
    %674 = vmatpush.bf16.msra.mxu0 %v651
    %675 = vmatmul.bf16.gmra.mxu0 %v602
    %v676 = vpop.f32.mrf.mxu0
    %v677 = vadd.f32 0.0, %v676
    %v678 = vpop.f32.mrf.mxu0
    %679 = vdwg.mxu0
    %v680 = vmul.f32 %v599, %v599
    %681 = vadd.xlane.f32.xlu0 %v680
    %v682 = vpop.xlane.xlu0 %681
    %v683 = vmax.f32 %v682, 1e-24
    %v684 = vrsqrt.pop %v683
    %v685 = vmul.f32 %v684, %v683
    %v686 = vmul.f32 %v685, %v684
    %v687 = vmul.f32 0.5, %v686
    %v688 = vsub.f32 1.5, %v687
    %v689 = vmul.f32 %v684, %v688
    %vm690 = vweird.f32 %v683
    %vm691 = vweird.f32 %v684
    %vm692 = vmor %vm690, %vm691
    %v693 = vsel %vm692, %v684, %v689
    %694 = vst [vmem:[#allocation5] sm:$0xff] %v599
    %v695 = vmul.f32 %v677, %v693
    %696 = vst [vmem:[#allocation6] sm:$0xff] %v695
    // Predicated region
    $region18: #{multibranch_forward.1} parent=1 // pred_check
      _
    $region19: #{multibranch_forward.1} parent=1 // pred_check_branch
      %698 = sbr.rel (0) target = $region21
    $region20: #{multibranch_forward.1} parent=1 // pred_region
      %700 = vsyncadd [#allocation4], 0
      %s702 = sshll.u32 [#allocation5], 4
      %s703 = int_to_ptr.vmem [resolvable:$true] %s702
      %s704 = sshll.u32 %s3, 4
      %s705 = int_to_ptr.hbm [resolvable:$true] %s704
      %707 = dma.vmem_to_hbm [thread:$0]  %s703, 128, %s705, [#allocation4]
    $region21: #{multibranch_forward.1} parent=1 // pred_fallthru
      _
    // Predicated region
    $region22: #{multibranch_forward.1} parent=1 // pred_check
      _
    $region23: #{multibranch_forward.1} parent=1 // pred_check_branch
      %709 = sbr.rel (0) target = $region25
    $region24: #{multibranch_forward.1} parent=1 // pred_region
      %711 = vsyncadd [#allocation7], 0
      %s713 = sshll.u32 [#allocation6], 4
      %s714 = int_to_ptr.vmem [resolvable:$true] %s713
      %s715 = sshll.u32 %s4, 4
      %s716 = int_to_ptr.hbm [resolvable:$true] %s715
      %718 = dma.vmem_to_hbm [thread:$0]  %s714, 128, %s716, [#allocation7]
    $region25: #{multibranch_forward.1} parent=1 // pred_fallthru
      _
    // Predicated region
    $region26: #{multibranch_forward.1} parent=1 // pred_check
      _
    $region27: #{multibranch_forward.1} parent=1 // pred_check_branch
      %720 = sbr.rel (0) target = $region29
    $region28: #{multibranch_forward.1} parent=1 // pred_region
      %722 = dma.done [#allocation4], 128
    $region29: #{multibranch_forward.1} parent=1 // pred_fallthru
      _
    // Predicated region
    $region30: #{multibranch_forward.1} parent=1 // pred_check
      _
    $region31: #{multibranch_forward.1} parent=1 // pred_check_branch
      %724 = sbr.rel (0) target = $region33
    $region32: #{multibranch_forward.1} parent=1 // pred_region
      %726 = dma.done [#allocation7], 128
    $region33: #{multibranch_forward.1} parent=1 // pred_fallthru
      _
    %727 = vsyncpa [#allocation3], 1
    %728 = vsyncpa [#allocation4], 1
    %729 = vsyncpa [#allocation7], 1

</llo_original>
